<compile_context>
chip_gen: v7x
topology: tpu7x:2x2x1
jax: 0.10.0
libtpu: 0.0.40
codegen_flags: <defaults>
</compile_context>

<pallas_src>
import jax
import jax.numpy as jnp
from jax.experimental import pallas as pl
from jax.experimental.pallas import tpu as pltpu


def _round_up(x, m):
    return ((x + m - 1) // m) * m


# ----------------------------------------------------------------------------
# Kernel A: per-edge message  msg[e, :] = x_src[e] @ MLP(edge_attr[e]).reshape(c_in, c_out)
# All channel dims are lane-dense (zero-padded to 128) so every slab is a full vreg.
# ----------------------------------------------------------------------------
def edge_msg_kernel(edge_attr_ref, x_src_ref, w1_ref, b1_ref, w2_ref, b2_ref, msg_ref):
    c_in = x_src_ref.shape[1]
    cp = msg_ref.shape[1]                       # padded c_out (multiple of 128)

    # Edge MLP: h = relu(ea @ W1 + b1); We = h @ W2 + b2   (padding is exact, see wrapper)
    h = jnp.dot(edge_attr_ref[...], w1_ref[...], preferred_element_type=jnp.float32)
    h = jnp.maximum(h + b1_ref[...], 0.0)
    we = jnp.dot(h, w2_ref[...], preferred_element_type=jnp.float32) + b2_ref[...]

    # Per-edge mixing: msg = sum_k x_src[:, k] * We[:, k*cp:(k+1)*cp]
    x_src = x_src_ref[...]
    msg = x_src[:, 0:1] * we[:, 0:cp]
    for k in range(1, c_in):
        msg = msg + x_src[:, k:k + 1] * we[:, k * cp:(k + 1) * cp]

    # bf16 for the scatter MXU matmul (rel err ~4e-3; keep f32 if training-grade accuracy is needed)
    msg_ref[...] = msg.astype(msg_ref.dtype)


# ----------------------------------------------------------------------------
# Kernel B: CSR scatter-add over destinations + root + bias.
# grid = (schedule steps,) ["arbitrary"].  Each step processes one (node tile, edge block)
# pair from a scalar-prefetched schedule; edges are pre-sorted by dst so each node tile only
# ever sees its own (contiguous) edge blocks, and each msg block is read from HBM once.
# ----------------------------------------------------------------------------
def scatter_kernel(tile_ref, eblk_ref, first_ref, last_ref, valid_ref,
                   dst_ref, msg_ref, x_ref, root_ref, bias_ref,
                   out_ref, acc_ref, iota_ref):
    s = pl.program_id(0)
    tn = acc_ref.shape[0]

    @pl.when(s == 0)
    def _():
        # Cached sublane iota 0..tn-1 (tile-independent), built once.
        iota_ref[...] = jax.lax.broadcasted_iota(jnp.int32, iota_ref.shape, 0)

    @pl.when(first_ref[s] == 1)
    def _():
        acc_ref[...] = jnp.zeros_like(acc_ref)

    @pl.when(valid_ref[s] == 1)
    def _():
        # Block-local one-hot: onehot[i, j] = 1 iff dst[j] == tile_base + i.
        # Single broadcast compare; padded edges carry dst = N_pad so they never match.
        rel = dst_ref[...] - tile_ref[s] * tn                         # (1, te) int32
        onehot = (iota_ref[...] == rel).astype(jnp.bfloat16)          # (tn, te)
        acc_ref[...] += jnp.dot(onehot, msg_ref[...],
                                preferred_element_type=jnp.float32)

    @pl.when(last_ref[s] == 1)
    def _():
        root_term = jnp.dot(x_ref[...], root_ref[...], preferred_element_type=jnp.float32)
        out_ref[...] = acc_ref[...] + root_term + bias_ref[...]


# ----------------------------------------------------------------------------
# Wrapper
# ----------------------------------------------------------------------------
def nnconv_forward(node_feats, edge_index, edge_attr, params):
    node_feats = node_feats.astype(jnp.float32)
    N, c_in = node_feats.shape
    E = edge_index.shape[1]
    edge_dim, c_out = params["w1"].shape

    if edge_attr is None:            # same default branch as the PyTorch module
        edge_attr = jnp.zeros((E, edge_dim), jnp.float32)
    edge_attr = edge_attr.astype(jnp.float32)

    LANE = 128
    CP = _round_up(c_out, LANE)      # lane-dense padded output channels
    HP = _round_up(c_out, LANE)      # lane-dense padded MLP hidden width

    # Tile sizes.  te large to amortize per-step overhead; tn moderate because with the CSR
    # schedule the scatter matmul flops scale with tn.  Working sets stay well under the
    # v7x 64 MiB VMEM (msg tile 512 KB, kernel A's `we` intermediate 4 MiB at te=2048).
    te = min(2048, _round_up(E, LANE))
    E_pad = _round_up(E, te)
    n_et = E_pad // te
    tn = min(256, _round_up(N, 8))
    N_pad = _round_up(N, tn)
    n_nt = N_pad // tn

    f32 = jnp.float32
    # ---- lane-dense (zero-padded) parameter layouts; padding is mathematically exact:
    # padded hidden cols of b1 are 0 -> relu(0)=0 -> multiplied by zero rows of w2p.
    w1p = jnp.zeros((edge_dim, HP), f32).at[:, :c_out].set(params["w1"].astype(f32))
    b1p = jnp.zeros((1, HP), f32).at[:, :c_out].set(params["b1"].astype(f32))
    w2r = params["w2"].astype(f32).reshape(c_out, c_in, c_out)
    w2p = jnp.zeros((HP, c_in, CP), f32).at[:c_out, :, :c_out].set(w2r).reshape(HP, c_in * CP)
    b2r = params["b2"].astype(f32).reshape(1, c_in, c_out)
    b2p = jnp.zeros((1, c_in, CP), f32).at[:, :, :c_out].set(b2r).reshape(1, c_in * CP)
    rootp = jnp.zeros((c_in, CP), f32).at[:, :c_out].set(params["root"].astype(f32))
    biasp = jnp.zeros((1, CP), f32).at[:, :c_out].set(params["bias"].astype(f32))

    # ---- pad edges and sort by destination (CSR ordering).
    # Padded edges get dst key = N_pad: sorted last, never inside any node tile's segment.
    src = edge_index[0].astype(jnp.int32)
    dst = edge_index[1].astype(jnp.int32)
    src_pad = jnp.zeros((E_pad,), jnp.int32).at[:E].set(src)
    dst_key = jnp.full((E_pad,), N_pad, jnp.int32).at[:E].set(dst)
    ea_pad = jnp.zeros((E_pad, edge_dim), f32).at[:E].set(edge_attr)

    perm = jnp.argsort(dst_key)
    dst_s = dst_key[perm]                       # sorted dst (padded entries = N_pad)
    src_s = src_pad[perm]
    ea_s = ea_pad[perm]

    x_pad = jnp.zeros((N_pad, c_in), f32).at[:N].set(node_feats)
    # TODO(synk): fold this gather into kernel A (pl.Element row-gather BlockSpec / scalar
    # prefetch of src) to save one XLA gather pass through HBM.
    x_src = jnp.take(x_pad, src_s, axis=0)                  # (E_pad, c_in), sorted order
    dst2d = dst_s.reshape(1, E_pad)                         # (1, E_pad) int32

    # ---- CSR schedule: for each node tile, the contiguous range of sorted-edge blocks.
    # Flattened into a static-length step list; contents are data-dependent and scalar-prefetched.
    tile_bounds = jnp.arange(n_nt + 1, dtype=jnp.int32) * tn
    e_bounds = jnp.searchsorted(dst_s, tile_bounds, side="left").astype(jnp.int32)
    start, end = e_bounds[:-1], e_bounds[1:]                # per-tile edge ranges (sorted order)
    has_edges = end > start
    nb = jnp.where(has_edges, (end - 1) // te - start // te + 1, 0).astype(jnp.int32)
    b_start = (start // te).astype(jnp.int32)
    steps_per_tile = jnp.maximum(nb, 1)                     # empty tiles still need root+bias
    cum = jnp.cumsum(steps_per_tile)                        # inclusive
    offs = cum - steps_per_tile                             # exclusive
    total = cum[-1]

    S_max = n_et + 2 * n_nt                                 # static bound on schedule length
    s_idx = jnp.arange(S_max, dtype=jnp.int32)
    tile_of = jnp.minimum(
        jnp.searchsorted(cum, s_idx, side="right").astype(jnp.int32), n_nt - 1)
    in_range = s_idx < total
    j = s_idx - offs[tile_of]
    eblk = jnp.clip(b_start[tile_of] + j, 0, n_et - 1).astype(jnp.int32)
    fill = eblk[jnp.maximum(total - 1, 0)]                  # padding steps reuse last real block
    step_eblk = jnp.where(in_range, eblk, fill).astype(jnp.int32)
    step_tile = tile_of
    step_first = (in_range & (j == 0)).astype(jnp.int32)
    step_last = (in_range & (j == steps_per_tile[tile_of] - 1)).astype(jnp.int32)
    step_valid = (in_range & has_edges[tile_of]).astype(jnp.int32)

    # ---------------- kernel A: per-edge messages (edges already in sorted order) ----------------
    msg = pl.pallas_call(
        edge_msg_kernel,
        out_shape=jax.ShapeDtypeStruct((E_pad, CP), jnp.bfloat16),
        grid_spec=pltpu.PrefetchScalarGridSpec(
            num_scalar_prefetch=0,
            grid=(n_et,),
            in_specs=[
                pl.BlockSpec((te, edge_dim), lambda e: (e, 0)),
                pl.BlockSpec((te, c_in), lambda e: (e, 0)),
                pl.BlockSpec((edge_dim, HP), lambda e: (0, 0)),
                pl.BlockSpec((1, HP), lambda e: (0, 0)),
                pl.BlockSpec((HP, c_in * CP), lambda e: (0, 0)),
                pl.BlockSpec((1, c_in * CP), lambda e: (0, 0)),
            ],
            out_specs=pl.BlockSpec((te, CP), lambda e: (e, 0)),
        ),
        compiler_params=pltpu.CompilerParams(
            dimension_semantics=("parallel",),
            vmem_limit_bytes=32 * 1024 * 1024,
        ),
    )(ea_s, x_src, w1p, b1p, w2p, b2p)

    # ---------------- kernel B: CSR scatter-add + root + bias ----------------
    # TODO(synk): for v7x megacore, split the CSR schedule into per-TC halves (leading
    # "parallel" axis of size 2); single arbitrary axis here keeps the schedule simple.
    cost = pl.CostEstimate(
        flops=2 * tn * E_pad * CP + 2 * N_pad * c_in * CP,
        transcendentals=0,
        bytes_accessed=E_pad * (CP * 2 + 4) + N_pad * (CP * 4 + c_in * 4) + S_max * 20,
    )
    out_pad = pl.pallas_call(
        scatter_kernel,
        out_shape=jax.ShapeDtypeStruct((N_pad, CP), jnp.float32),
        grid_spec=pltpu.PrefetchScalarGridSpec(
            num_scalar_prefetch=5,
            grid=(S_max,),
            in_specs=[
                pl.BlockSpec((1, te), lambda s, t, e, f, l, v: (0, e[s])),
                pl.BlockSpec((te, CP), lambda s, t, e, f, l, v: (e[s], 0)),
                pl.BlockSpec((tn, c_in), lambda s, t, e, f, l, v: (t[s], 0)),
                pl.BlockSpec((c_in, CP), lambda s, t, e, f, l, v: (0, 0)),
                pl.BlockSpec((1, CP), lambda s, t, e, f, l, v: (0, 0)),
            ],
            out_specs=pl.BlockSpec((tn, CP), lambda s, t, e, f, l, v: (t[s], 0)),
            scratch_shapes=[pltpu.VMEM((tn, CP), jnp.float32),
                            pltpu.VMEM((tn, 1), jnp.int32)],
        ),
        compiler_params=pltpu.CompilerParams(
            dimension_semantics=("arbitrary",),
            vmem_limit_bytes=32 * 1024 * 1024,
        ),
        cost_estimate=cost,
    )(step_tile, step_eblk, step_first, step_last, step_valid,
      dst2d, msg, x_pad, rootp, biasp)

    return out_pad[:N, :c_out]


# ----------------------------------------------------------------------------
# Params + pure-JAX reference
# ----------------------------------------------------------------------------
def init_params(key, c_in, c_out, edge_dim):
    ks = jax.random.split(key, 6)

    def unif(k, shape, fan_in):
        bound = 1.0 / jnp.sqrt(jnp.float32(fan_in))
        return jax.random.uniform(k, shape, jnp.float32, -bound, bound)

    return {
        "w1": unif(ks[0], (edge_dim, c_out), edge_dim),
        "b1": unif(ks[1], (1, c_out), edge_dim),
        "w2": unif(ks[2], (c_out, c_in * c_out), c_out),
        "b2": unif(ks[3], (1, c_in * c_out), c_out),
        "root": unif(ks[4], (c_in, c_out), c_in),
        "bias": unif(ks[5], (1, c_out), c_in),
    }


def nnconv_reference(node_feats, edge_index, edge_attr, params):
    N, c_in = node_feats.shape
    E = edge_index.shape[1]
    edge_dim, c_out = params["w1"].shape
    if edge_attr is None:
        edge_attr = jnp.zeros((E, edge_dim), jnp.float32)
    src, dst = edge_index[0], edge_index[1]
    h = jnp.maximum(edge_attr @ params["w1"] + params["b1"], 0.0)
    We = (h @ params["w2"] + params["b2"]).reshape(E, c_in, c_out)
    msg = jnp.einsum("ec,eco->eo", node_feats[src], We)
    agg = jnp.zeros((N, c_out), jnp.float32).at[dst].add(msg)
    return agg + node_feats @ params["root"] + params["bias"]


if __name__ == "__main__":
    c_in, c_out, edge_dim = 4, 8, 6
    N, E = 16, 32

    key = jax.random.PRNGKey(0)
    k_x, k_src, k_dst, k_attr, k_param = jax.random.split(key, 5)

    node_feats = jax.random.normal(k_x, (N, c_in), jnp.float32)
    src = jax.random.randint(k_src, (E,), 0, N, dtype=jnp.int32)
    dst = jax.random.randint(k_dst, (E,), 0, N, dtype=jnp.int32)
    edge_index = jnp.stack([src, dst], axis=0)                 # (2, E)
    edge_attr = jax.random.normal(k_attr, (E, edge_dim), jnp.float32)

    params = init_params(k_param, c_in, c_out, edge_dim)

    # Path 1: edge_attr provided.
    out = jax.block_until_ready(nnconv_forward(node_feats, edge_index, edge_attr, params))
    ref = nnconv_reference(node_feats, edge_index, edge_attr, params)
    assert out.shape == (N, c_out) and out.dtype == jnp.float32
    assert jnp.allclose(out, ref, rtol=2e-2, atol=2e-2), float(jnp.max(jnp.abs(out - ref)))

    # Path 2: edge_attr=None -> zeros(E, edge_dim), as in the module's default branch.
    out_none = jax.block_until_ready(nnconv_forward(node_feats, edge_index, None, params))
    ref_none = nnconv_reference(node_feats, edge_index, None, params)
    assert out_none.shape == (N, c_out)
    assert jnp.allclose(out_none, ref_none, rtol=2e-2, atol=2e-2)

    print("KERNEL_OK")
</pallas_src>

<mosaic_0001>
module attributes {stable_mosaic.version = 11 : i64} {
  func.func @edge_msg_kernel(%arg0: i32, %arg1: memref<128x6xf32, #tpu.memory_space<vmem>>, %arg2: memref<128x4xf32, #tpu.memory_space<vmem>>, %arg3: memref<6x128xf32, #tpu.memory_space<vmem>>, %arg4: memref<1x128xf32, #tpu.memory_space<vmem>>, %arg5: memref<128x512xf32, #tpu.memory_space<vmem>>, %arg6: memref<1x512xf32, #tpu.memory_space<vmem>>, %arg7: memref<128x128xbf16, #tpu.memory_space<vmem>>) attributes {dimension_semantics = [#tpu.dimension_semantics<parallel>], iteration_bounds = array<i64: 1>, scalar_prefetch = 0 : i64, scratch_operands = 0 : i64, tpu.core_type = #tpu.core_type<tc>, window_params = [{transform_indices = @transform_0, window_bounds = array<i64: 128, 6>}, {transform_indices = @transform_1, window_bounds = array<i64: 128, 4>}, {pipeline_mode = #tpu.pipeline_mode<synchronous>, transform_indices = @transform_2, window_bounds = array<i64: 6, 128>}, {pipeline_mode = #tpu.pipeline_mode<synchronous>, transform_indices = @transform_3, window_bounds = array<i64: 1, 128>}, {pipeline_mode = #tpu.pipeline_mode<synchronous>, transform_indices = @transform_4, window_bounds = array<i64: 128, 512>}, {pipeline_mode = #tpu.pipeline_mode<synchronous>, transform_indices = @transform_5, window_bounds = array<i64: 1, 512>}, {transform_indices = @transform_6, window_bounds = array<i64: 128, 128>}]} {
    %c0 = arith.constant 0 : index
    %c0_0 = arith.constant 0 : index
    %0 = vector.load %arg1[%c0, %c0_0] : memref<128x6xf32, #tpu.memory_space<vmem>>, vector<128x6xf32>
    %c0_1 = arith.constant 0 : index
    %c0_2 = arith.constant 0 : index
    %1 = vector.load %arg3[%c0_1, %c0_2] : memref<6x128xf32, #tpu.memory_space<vmem>>, vector<6x128xf32>
    %cst = arith.constant dense<0.000000e+00> : vector<128x128xf32>
    %2 = tpu.matmul %0, %1, %cst {dimension_numbers = #tpu.dot_dimension_numbers<[1], [0], [0], [1], [0, 0, 1, 1], [], []>} : vector<128x6xf32>, vector<6x128xf32>, vector<128x128xf32> -> vector<128x128xf32>
    %c0_3 = arith.constant 0 : index
    %c0_4 = arith.constant 0 : index
    %3 = vector.load %arg4[%c0_3, %c0_4] : memref<1x128xf32, #tpu.memory_space<vmem>>, vector<1x128xf32>
    %4 = vector.broadcast %3 : vector<1x128xf32> to vector<128x128xf32>
    %5 = arith.addf %2, %4 : vector<128x128xf32>
    %cst_5 = arith.constant 0.000000e+00 : f32
    %6 = vector.broadcast %cst_5 : f32 to vector<128x128xf32>
    %7 = arith.maximumf %5, %6 : vector<128x128xf32>
    %c0_6 = arith.constant 0 : index
    %c0_7 = arith.constant 0 : index
    %8 = vector.load %arg5[%c0_6, %c0_7] : memref<128x512xf32, #tpu.memory_space<vmem>>, vector<128x512xf32>
    %cst_8 = arith.constant dense<0.000000e+00> : vector<128x512xf32>
    %9 = tpu.matmul %7, %8, %cst_8 {dimension_numbers = #tpu.dot_dimension_numbers<[1], [0], [0], [1], [0, 0, 1, 1], [], []>} : vector<128x128xf32>, vector<128x512xf32>, vector<128x512xf32> -> vector<128x512xf32>
    %c0_9 = arith.constant 0 : index
    %c0_10 = arith.constant 0 : index
    %10 = vector.load %arg6[%c0_9, %c0_10] : memref<1x512xf32, #tpu.memory_space<vmem>>, vector<1x512xf32>
    %11 = vector.broadcast %10 : vector<1x512xf32> to vector<128x512xf32>
    %12 = arith.addf %9, %11 : vector<128x512xf32>
    %c0_11 = arith.constant 0 : index
    %c0_12 = arith.constant 0 : index
    %13 = vector.load %arg2[%c0_11, %c0_12] : memref<128x4xf32, #tpu.memory_space<vmem>>, vector<128x4xf32>
    %14 = vector.extract_strided_slice %13 {offsets = [0, 0], sizes = [128, 1], strides = [1, 1]} : vector<128x4xf32> to vector<128x1xf32>
    %15 = vector.extract_strided_slice %12 {offsets = [0, 0], sizes = [128, 128], strides = [1, 1]} : vector<128x512xf32> to vector<128x128xf32>
    %16 = vector.broadcast %14 : vector<128x1xf32> to vector<128x128xf32>
    %17 = arith.mulf %16, %15 : vector<128x128xf32>
    %18 = vector.extract_strided_slice %13 {offsets = [0, 1], sizes = [128, 1], strides = [1, 1]} : vector<128x4xf32> to vector<128x1xf32>
    %19 = vector.extract_strided_slice %12 {offsets = [0, 128], sizes = [128, 128], strides = [1, 1]} : vector<128x512xf32> to vector<128x128xf32>
    %20 = vector.broadcast %18 : vector<128x1xf32> to vector<128x128xf32>
    %21 = arith.mulf %20, %19 : vector<128x128xf32>
    %22 = arith.addf %17, %21 : vector<128x128xf32>
    %23 = vector.extract_strided_slice %13 {offsets = [0, 2], sizes = [128, 1], strides = [1, 1]} : vector<128x4xf32> to vector<128x1xf32>
    %24 = vector.extract_strided_slice %12 {offsets = [0, 256], sizes = [128, 128], strides = [1, 1]} : vector<128x512xf32> to vector<128x128xf32>
    %25 = vector.broadcast %23 : vector<128x1xf32> to vector<128x128xf32>
    %26 = arith.mulf %25, %24 : vector<128x128xf32>
    %27 = arith.addf %22, %26 : vector<128x128xf32>
    %28 = vector.extract_strided_slice %13 {offsets = [0, 3], sizes = [128, 1], strides = [1, 1]} : vector<128x4xf32> to vector<128x1xf32>
    %29 = vector.extract_strided_slice %12 {offsets = [0, 384], sizes = [128, 128], strides = [1, 1]} : vector<128x512xf32> to vector<128x128xf32>
    %30 = vector.broadcast %28 : vector<128x1xf32> to vector<128x128xf32>
    %31 = arith.mulf %30, %29 : vector<128x128xf32>
    %32 = arith.addf %27, %31 : vector<128x128xf32>
    %33 = arith.truncf %32 : vector<128x128xf32> to vector<128x128xbf16>
    %c0_13 = arith.constant 0 : index
    %c0_14 = arith.constant 0 : index
    %34 = vector.load %arg7[%c0_13, %c0_14] : memref<128x128xbf16, #tpu.memory_space<vmem>>, vector<128x128xbf16>
    tpu.vector_store %arg7[%c0_13, %c0_14], %33 {strides = array<i32>} : memref<128x128xbf16, #tpu.memory_space<vmem>>, vector<128x128xbf16>,
    return
  }
  func.func @transform_0(%arg0: i32) -> (i32, i32) {
    %c0_i32 = arith.constant 0 : i32
    %c0_i32_0 = arith.constant 0 : i32
    return %arg0, %c0_i32 : i32, i32
  }
  func.func @transform_1(%arg0: i32) -> (i32, i32) {
    %c0_i32 = arith.constant 0 : i32
    %c0_i32_0 = arith.constant 0 : i32
    return %arg0, %c0_i32 : i32, i32
  }
  func.func @transform_2(%arg0: i32) -> (i32, i32) {
    %c0_i32 = arith.constant 0 : i32
    %c0_i32_0 = arith.constant 0 : i32
    %c0_i32_1 = arith.constant 0 : i32
    return %c0_i32, %c0_i32_0 : i32, i32
  }
  func.func @transform_3(%arg0: i32) -> (i32, i32) {
    %c0_i32 = arith.constant 0 : i32
    %c0_i32_0 = arith.constant 0 : i32
    %c0_i32_1 = arith.constant 0 : i32
    return %c0_i32, %c0_i32_0 : i32, i32
  }
  func.func @transform_4(%arg0: i32) -> (i32, i32) {
    %c0_i32 = arith.constant 0 : i32
    %c0_i32_0 = arith.constant 0 : i32
    %c0_i32_1 = arith.constant 0 : i32
    return %c0_i32, %c0_i32_0 : i32, i32
  }
  func.func @transform_5(%arg0: i32) -> (i32, i32) {
    %c0_i32 = arith.constant 0 : i32
    %c0_i32_0 = arith.constant 0 : i32
    %c0_i32_1 = arith.constant 0 : i32
    return %c0_i32, %c0_i32_0 : i32, i32
  }
  func.func @transform_6(%arg0: i32) -> (i32, i32) {
    %c0_i32 = arith.constant 0 : i32
    %c0_i32_0 = arith.constant 0 : i32
    return %arg0, %c0_i32 : i32, i32
  }
}

</mosaic_0001>

<llo_original>
// kernel: tpu_custom_call.1
$region0: #{tpu_custom_call.1}
  #allocation0 [shape = 'u32[]', space=smem, size = 0x4, offset = 0x4, fixed_abs, tag = 'smem constant byte address 0x4 - core index']
  #allocation1 [shape = 'u32[144,128]{1,0:T(1,128)}', space=vmem, size = 0x12000, scoped, tag = 'internal scratch']
  %s0 = inlined_call_operand.vmem [shape: f32[128,6], index: 0, kind: input, shape index: {}]
  %s1 = inlined_call_operand.vmem [shape: f32[128,4], index: 1, kind: input, shape index: {}]
  %s2 = inlined_call_operand.vmem [shape: f32[6,128], index: 2, kind: input, shape index: {}]
  %s3 = inlined_call_operand.vmem [shape: f32[1,128], index: 3, kind: input, shape index: {}]
  %s4 = inlined_call_operand.hbm [shape: f32[128,512], index: 4, kind: input, shape index: {}]
  %s5 = inlined_call_operand.vmem [shape: f32[1,512], index: 5, kind: input, shape index: {}]
  %s6 = inlined_call_operand.hbm [shape: bf16[128,128], index: 6, kind: output, shape index: {}]
  %s7 = sld [smem:[#allocation0]]
  $region38: #{tpu_custom_call.1} parent=0
    _
  %s9 = ssub.s32 1, %s7
  %s10 = scalar_select 0, %s9, %s7
  $region1: #{tpu_custom_call.1} parent=0
    #allocation2 [shape = 'u8[262144]{0}', space=vmem, size = 0x40000, scoped, tag = 'input window, operand 4, single buffered']
    #allocation3 [shape = 's32[1]{0}', space=sflag, size = 0x4, scoped, tag = 'scoped memory for tpu_custom_call.1']
    #allocation4 [shape = 's32[1]{0}', space=sflag, size = 0x4, scoped, tag = 'scoped memory for tpu_custom_call.1']
    #allocation5 [shape = 'u8[32768]{0}', space=vmem, size = 0x8000, scoped, tag = 'output window, operand 0, single buffered']
    %11 = vsyncpa [#allocation3], 0
    %12 = vsyncpa [#allocation4], 0
    // Predicated region
    $region2: #{tpu_custom_call.1} parent=1 // pred_check
      _
    $region3: #{tpu_custom_call.1} parent=1 // pred_check_branch
      %14 = sbr.rel (0) target = $region5
    $region4: #{tpu_custom_call.1} parent=1 // pred_region
      _
    $region5: #{tpu_custom_call.1} parent=1 // pred_fallthru
      _
    // Predicated region
    $region6: #{tpu_custom_call.1} parent=1 // pred_check
      _
    $region7: #{tpu_custom_call.1} parent=1 // pred_check_branch
      %16 = sbr.rel (0) target = $region9
    $region8: #{tpu_custom_call.1} parent=1 // pred_region
      _
    $region9: #{tpu_custom_call.1} parent=1 // pred_fallthru
      _
    // Predicated region
    $region10: #{tpu_custom_call.1} parent=1 // pred_check
      _
    $region11: #{tpu_custom_call.1} parent=1 // pred_check_branch
      %18 = sbr.rel (0) target = $region13
    $region12: #{tpu_custom_call.1} parent=1 // pred_region
      _
    $region13: #{tpu_custom_call.1} parent=1 // pred_fallthru
      _
    // Predicated region
    $region14: #{tpu_custom_call.1} parent=1 // pred_check
      _
    $region15: #{tpu_custom_call.1} parent=1 // pred_check_branch
      %20 = sbr.rel (0) target = $region17
    $region16: #{tpu_custom_call.1} parent=1 // pred_region
      _
    $region17: #{tpu_custom_call.1} parent=1 // pred_fallthru
      _
    // Predicated region
    $region18: #{tpu_custom_call.1} parent=1 // pred_check
      _
    $region19: #{tpu_custom_call.1} parent=1 // pred_check_branch
      %22 = sbr.rel (0) target = $region21
    $region20: #{tpu_custom_call.1} parent=1 // pred_region
      %s24 = ssub.s32 8192, 8192
      %25 = vsyncadd [#allocation3], %s24
      %s26 = sshll.u32 [#allocation2], 4
      %s27 = int_to_ptr.vmem [resolvable:$true] %s26
      %32 = dma.hbm_to_vmem [thread:$0]  %s4, 8192, %s27, [#allocation3], 512, 512, 32
    $region21: #{tpu_custom_call.1} parent=1 // pred_fallthru
      _
    // Predicated region
    $region22: #{tpu_custom_call.1} parent=1 // pred_check
      _
    $region23: #{tpu_custom_call.1} parent=1 // pred_check_branch
      %34 = sbr.rel (0) target = $region25
    $region24: #{tpu_custom_call.1} parent=1 // pred_region
      _
    $region25: #{tpu_custom_call.1} parent=1 // pred_fallthru
      _
    // Predicated region
    $region26: #{tpu_custom_call.1} parent=1 // pred_check
      _
    $region27: #{tpu_custom_call.1} parent=1 // pred_check_branch
      %36 = sbr.rel (0) target = $region29
    $region28: #{tpu_custom_call.1} parent=1 // pred_region
      %37 = dma.done [#allocation3], 8192
    $region29: #{tpu_custom_call.1} parent=1 // pred_fallthru
      _
    %v38 = vld [vmem:[%s0] sm:$0xff]
    %v39 = vld [vmem:[%s0 + $0x8] sm:$0xff]
    %v40 = vld [vmem:[%s0 + $0x10] sm:$0xff]
    %v41 = vld [vmem:[%s0 + $0x18] sm:$0xff]
    %v42 = vld [vmem:[%s0 + $0x20] sm:$0xff]
    %v43 = vld [vmem:[%s0 + $0x28] sm:$0xff]
    %v44 = vld [vmem:[%s0 + $0x30] sm:$0xff]
    %v45 = vld [vmem:[%s0 + $0x38] sm:$0xff]
    %v46 = vld [vmem:[%s0 + $0x40] sm:$0xff]
    %v47 = vld [vmem:[%s0 + $0x48] sm:$0xff]
    %v48 = vld [vmem:[%s0 + $0x50] sm:$0xff]
    %v49 = vld [vmem:[%s0 + $0x58] sm:$0xff]
    %v50 = vld [vmem:[%s0 + $0x60] sm:$0xff]
    %v51 = vld [vmem:[%s0 + $0x68] sm:$0xff]
    %v52 = vld [vmem:[%s0 + $0x70] sm:$0xff]
    %v53 = vld [vmem:[%s0 + $0x78] sm:$0xff]
    %v54 = vld [vmem:[%s2] sm:$0x3f]
    %v55 = vld [vmem:[%s3] sm:$0x1]
    %v57 = vlaneseq
    %v58 = vshrl.u32 %v57, 7
    %v59 = vsub.s32 0, %v58
    %v60 = vrot.slane %v55, %v59
    %vm62 = vcmask 48128
    %v64 = vsel %vm62, %v38, 0
    %v67 = vsel %vm62, %v39, 0
    %v70 = vsel %vm62, %v40, 0
    %v73 = vsel %vm62, %v41, 0
    %v76 = vsel %vm62, %v42, 0
    %v79 = vsel %vm62, %v43, 0
    %v82 = vsel %vm62, %v44, 0
    %v85 = vsel %vm62, %v45, 0
    %v88 = vsel %vm62, %v46, 0
    %v91 = vsel %vm62, %v47, 0
    %v94 = vsel %vm62, %v48, 0
    %v97 = vsel %vm62, %v49, 0
    %v100 = vsel %vm62, %v50, 0
    %v103 = vsel %vm62, %v51, 0
    %v106 = vsel %vm62, %v52, 0
    %v109 = vsel %vm62, %v53, 0
    %vm111 = vcmask 1045504
    %v113 = vsel %vm111, %v54, 0
    %115 = vmatprep.subr.mxu0 0.0
    %116 = vmatpush1.msra.mxu0 %v113
    %117 = vmatprep.subr.mxu0 0.0
    %118 = vmatpush1.msra.mxu0 0.0
    %119 = vmatprep.subr.mxu0 0.0
    %120 = vmatpush1.msra.mxu0 0.0
    %121 = vmatprep.subr.mxu0 0.0
    %122 = vmatpush1.msra.mxu0 0.0
    %123 = vmatprep.subr.mxu0 0.0
    %124 = vmatpush1.msra.mxu0 0.0
    %125 = vmatprep.subr.mxu0 0.0
    %126 = vmatpush1.msra.mxu0 0.0
    %127 = vmatprep.subr.mxu0 0.0
    %128 = vmatpush1.msra.mxu0 0.0
    %129 = vmatprep.subr.mxu0 0.0
    %130 = vmatpush1.msra.mxu0 0.0
    %131 = vmatprep.subr.mxu0 0.0
    %132 = vmatpush1.msra.mxu0 0.0
    %133 = vmatprep.subr.mxu0 0.0
    %134 = vmatpush1.msra.mxu0 0.0
    %135 = vmatprep.subr.mxu0 0.0
    %136 = vmatpush1.msra.mxu0 0.0
    %137 = vmatprep.subr.mxu0 0.0
    %138 = vmatpush1.msra.mxu0 0.0
    %139 = vmatprep.subr.mxu0 0.0
    %140 = vmatpush1.msra.mxu0 0.0
    %141 = vmatprep.subr.mxu0 0.0
    %142 = vmatpush1.msra.mxu0 0.0
    %143 = vmatprep.subr.mxu0 0.0
    %144 = vmatpush1.msra.mxu0 0.0
    %145 = vmatprep.subr.mxu0 0.0
    %146 = vmatpush1.msra.mxu0 0.0
    %147 = vmatprep.subr.mxu0 0.0
    %148 = vmatpush1.msra.mxu0 0.0
    %149 = vmatprep.subr.mxu0 0.0
    %150 = vmatpush1.msra.mxu0 0.0
    %151 = vmatprep.subr.mxu0 0.0
    %152 = vmatpush1.msra.mxu0 0.0
    %153 = vmatprep.subr.mxu0 0.0
    %154 = vmatpush1.msra.mxu0 0.0
    %155 = vmatprep.subr.mxu0 0.0
    %156 = vmatpush1.msra.mxu0 0.0
    %157 = vmatprep.subr.mxu0 0.0
    %158 = vmatpush1.msra.mxu0 0.0
    %159 = vmatprep.subr.mxu0 0.0
    %160 = vmatpush1.msra.mxu0 0.0
    %161 = vmatprep.subr.mxu0 0.0
    %162 = vmatpush1.msra.mxu0 0.0
    %163 = vmatprep.subr.mxu0 0.0
    %164 = vmatpush1.msra.mxu0 0.0
    %165 = vmatprep.subr.mxu0 0.0
    %166 = vmatpush1.msra.mxu0 0.0
    %167 = vmatprep.subr.mxu0 0.0
    %168 = vmatpush1.msra.mxu0 0.0
    %169 = vmatprep.subr.mxu0 0.0
    %170 = vmatpush1.msra.mxu0 0.0
    %171 = vmatprep.subr.mxu0 0.0
    %172 = vmatpush1.msra.mxu0 0.0
    %173 = vmatprep.subr.mxu0 0.0
    %174 = vmatpush1.msra.mxu0 0.0
    %175 = vmatprep.subr.mxu0 0.0
    %176 = vmatpush1.msra.mxu0 0.0
    %177 = vmatprep.subr.mxu0 0.0
    %178 = vmatpush1.msra.mxu0 0.0
    %179 = vmatprep.mubr.f32.mxu0 0.0
    %180 = vmatmul.mubr.f32.gmra.mrb[0].mxu0 %v64
    %v181 = vpop.f32.mrb[0].mxu0
    %v182 = vadd.f32 %v60, %v181
    %v183 = vpop.f32.mrb[0].mxu0
    %184 = vmatprep.mubr.f32.mxu0 0.0
    %185 = vmatmul.mubr.f32.gmra.mrb[0].mxu0 %v67
    %v186 = vpop.f32.mrb[0].mxu0
    %v187 = vadd.f32 %v60, %v186
    %v188 = vpop.f32.mrb[0].mxu0
    %189 = vmatprep.mubr.f32.mxu0 0.0
    %190 = vmatmul.mubr.f32.gmra.mrb[0].mxu0 %v70
    %v191 = vpop.f32.mrb[0].mxu0
    %v192 = vadd.f32 %v60, %v191
    %v193 = vpop.f32.mrb[0].mxu0
    %194 = vmatprep.mubr.f32.mxu0 0.0
    %195 = vmatmul.mubr.f32.gmra.mrb[0].mxu0 %v73
    %v196 = vpop.f32.mrb[0].mxu0
    %v197 = vadd.f32 %v60, %v196
    %v198 = vpop.f32.mrb[0].mxu0
    %199 = vmatprep.mubr.f32.mxu0 0.0
    %200 = vmatmul.mubr.f32.gmra.mrb[0].mxu0 %v76
    %v201 = vpop.f32.mrb[0].mxu0
    %v202 = vadd.f32 %v60, %v201
    %v203 = vpop.f32.mrb[0].mxu0
    %204 = vmatprep.mubr.f32.mxu0 0.0
    %205 = vmatmul.mubr.f32.gmra.mrb[0].mxu0 %v79
    %v206 = vpop.f32.mrb[0].mxu0
    %v207 = vadd.f32 %v60, %v206
    %v208 = vpop.f32.mrb[0].mxu0
    %209 = vmatprep.mubr.f32.mxu0 0.0
    %210 = vmatmul.mubr.f32.gmra.mrb[0].mxu0 %v82
    %v211 = vpop.f32.mrb[0].mxu0
    %v212 = vadd.f32 %v60, %v211
    %v213 = vpop.f32.mrb[0].mxu0
    %214 = vmatprep.mubr.f32.mxu0 0.0
    %215 = vmatmul.mubr.f32.gmra.mrb[0].mxu0 %v85
    %v216 = vpop.f32.mrb[0].mxu0
    %v217 = vadd.f32 %v60, %v216
    %v218 = vpop.f32.mrb[0].mxu0
    %219 = vmatprep.mubr.f32.mxu0 0.0
    %220 = vmatmul.mubr.f32.gmra.mrb[0].mxu0 %v88
    %v221 = vpop.f32.mrb[0].mxu0
    %v222 = vadd.f32 %v60, %v221
    %v223 = vpop.f32.mrb[0].mxu0
    %224 = vmatprep.mubr.f32.mxu0 0.0
    %225 = vmatmul.mubr.f32.gmra.mrb[0].mxu0 %v91
    %v226 = vpop.f32.mrb[0].mxu0
    %v227 = vadd.f32 %v60, %v226
    %v228 = vpop.f32.mrb[0].mxu0
    %229 = vmatprep.mubr.f32.mxu0 0.0
    %230 = vmatmul.mubr.f32.gmra.mrb[0].mxu0 %v94
    %v231 = vpop.f32.mrb[0].mxu0
    %v232 = vadd.f32 %v60, %v231
    %v233 = vpop.f32.mrb[0].mxu0
    %234 = vmatprep.mubr.f32.mxu0 0.0
    %235 = vmatmul.mubr.f32.gmra.mrb[0].mxu0 %v97
    %v236 = vpop.f32.mrb[0].mxu0
    %v237 = vadd.f32 %v60, %v236
    %v238 = vpop.f32.mrb[0].mxu0
    %239 = vmatprep.mubr.f32.mxu0 0.0
    %240 = vmatmul.mubr.f32.gmra.mrb[0].mxu0 %v100
    %v241 = vpop.f32.mrb[0].mxu0
    %v242 = vadd.f32 %v60, %v241
    %v243 = vpop.f32.mrb[0].mxu0
    %244 = vmatprep.mubr.f32.mxu0 0.0
    %245 = vmatmul.mubr.f32.gmra.mrb[0].mxu0 %v103
    %v246 = vpop.f32.mrb[0].mxu0
    %v247 = vadd.f32 %v60, %v246
    %v248 = vpop.f32.mrb[0].mxu0
    %249 = vmatprep.mubr.f32.mxu0 0.0
    %250 = vmatmul.mubr.f32.gmra.mrb[0].mxu0 %v106
    %v251 = vpop.f32.mrb[0].mxu0
    %v252 = vadd.f32 %v60, %v251
    %v253 = vpop.f32.mrb[0].mxu0
    %254 = vmatprep.mubr.f32.mxu0 0.0
    %255 = vmatmul.mubr.f32.gmra.mrb[0].mxu0 %v109
    %v256 = vpop.f32.mrb[0].mxu0
    %v257 = vadd.f32 %v60, %v256
    %v258 = vpop.f32.mrb[0].mxu0
    %259 = vdwg.mxu0
    %v260 = vmax.f32 %v182, 0.0
    %v261 = vmax.f32 %v187, 0.0
    %v262 = vmax.f32 %v192, 0.0
    %v263 = vmax.f32 %v197, 0.0
    %v264 = vmax.f32 %v202, 0.0
    %v265 = vmax.f32 %v207, 0.0
    %v266 = vmax.f32 %v212, 0.0
    %v267 = vmax.f32 %v217, 0.0
    %v268 = vmax.f32 %v222, 0.0
    %v269 = vmax.f32 %v227, 0.0
    %v270 = vmax.f32 %v232, 0.0
    %v271 = vmax.f32 %v237, 0.0
    %v272 = vmax.f32 %v242, 0.0
    %v273 = vmax.f32 %v247, 0.0
    %v274 = vmax.f32 %v252, 0.0
    %v275 = vmax.f32 %v257, 0.0
    %v276 = vld [vmem:[#allocation2] sm:$0xff]
    %v277 = vld [vmem:[#allocation2 + $0x8] sm:$0xff]
    %v278 = vld [vmem:[#allocation2 + $0x10] sm:$0xff]
    %v279 = vld [vmem:[#allocation2 + $0x18] sm:$0xff]
    %v280 = vld [vmem:[#allocation2 + $0x20] sm:$0xff]
    %v281 = vld [vmem:[#allocation2 + $0x28] sm:$0xff]
    %v282 = vld [vmem:[#allocation2 + $0x30] sm:$0xff]
    %v283 = vld [vmem:[#allocation2 + $0x38] sm:$0xff]
    %v284 = vld [vmem:[#allocation2 + $0x40] sm:$0xff]
    %v285 = vld [vmem:[#allocation2 + $0x48] sm:$0xff]
    %v286 = vld [vmem:[#allocation2 + $0x50] sm:$0xff]
    %v287 = vld [vmem:[#allocation2 + $0x58] sm:$0xff]
    %v288 = vld [vmem:[#allocation2 + $0x60] sm:$0xff]
    %v289 = vld [vmem:[#allocation2 + $0x68] sm:$0xff]
    %v290 = vld [vmem:[#allocation2 + $0x70] sm:$0xff]
    %v291 = vld [vmem:[#allocation2 + $0x78] sm:$0xff]
    %v292 = vld [vmem:[#allocation2 + $0x80] sm:$0xff]
    %v293 = vld [vmem:[#allocation2 + $0x88] sm:$0xff]
    %v294 = vld [vmem:[#allocation2 + $0x90] sm:$0xff]
    %v295 = vld [vmem:[#allocation2 + $0x98] sm:$0xff]
    %v296 = vld [vmem:[#allocation2 + $0xa0] sm:$0xff]
    %v297 = vld [vmem:[#allocation2 + $0xa8] sm:$0xff]
    %v298 = vld [vmem:[#allocation2 + $0xb0] sm:$0xff]
    %v299 = vld [vmem:[#allocation2 + $0xb8] sm:$0xff]
    %v300 = vld [vmem:[#allocation2 + $0xc0] sm:$0xff]
    %v301 = vld [vmem:[#allocation2 + $0xc8] sm:$0xff]
    %v302 = vld [vmem:[#allocation2 + $0xd0] sm:$0xff]
    %v303 = vld [vmem:[#allocation2 + $0xd8] sm:$0xff]
    %v304 = vld [vmem:[#allocation2 + $0xe0] sm:$0xff]
    %v305 = vld [vmem:[#allocation2 + $0xe8] sm:$0xff]
    %v306 = vld [vmem:[#allocation2 + $0xf0] sm:$0xff]
    %v307 = vld [vmem:[#allocation2 + $0xf8] sm:$0xff]
    %v308 = vld [vmem:[#allocation2 + $0x100] sm:$0xff]
    %v309 = vld [vmem:[#allocation2 + $0x108] sm:$0xff]
    %v310 = vld [vmem:[#allocation2 + $0x110] sm:$0xff]
    %v311 = vld [vmem:[#allocation2 + $0x118] sm:$0xff]
    %v312 = vld [vmem:[#allocation2 + $0x120] sm:$0xff]
    %v313 = vld [vmem:[#allocation2 + $0x128] sm:$0xff]
    %v314 = vld [vmem:[#allocation2 + $0x130] sm:$0xff]
    %v315 = vld [vmem:[#allocation2 + $0x138] sm:$0xff]
    %v316 = vld [vmem:[#allocation2 + $0x140] sm:$0xff]
    %v317 = vld [vmem:[#allocation2 + $0x148] sm:$0xff]
    %v318 = vld [vmem:[#allocation2 + $0x150] sm:$0xff]
    %v319 = vld [vmem:[#allocation2 + $0x158] sm:$0xff]
    %v320 = vld [vmem:[#allocation2 + $0x160] sm:$0xff]
    %v321 = vld [vmem:[#allocation2 + $0x168] sm:$0xff]
    %v322 = vld [vmem:[#allocation2 + $0x170] sm:$0xff]
    %v323 = vld [vmem:[#allocation2 + $0x178] sm:$0xff]
    %v324 = vld [vmem:[#allocation2 + $0x180] sm:$0xff]
    %v325 = vld [vmem:[#allocation2 + $0x188] sm:$0xff]
    %v326 = vld [vmem:[#allocation2 + $0x190] sm:$0xff]
    %v327 = vld [vmem:[#allocation2 + $0x198] sm:$0xff]
    %v328 = vld [vmem:[#allocation2 + $0x1a0] sm:$0xff]
    %v329 = vld [vmem:[#allocation2 + $0x1a8] sm:$0xff]
    %v330 = vld [vmem:[#allocation2 + $0x1b0] sm:$0xff]
    %v331 = vld [vmem:[#allocation2 + $0x1b8] sm:$0xff]
    %v332 = vld [vmem:[#allocation2 + $0x1c0] sm:$0xff]
    %v333 = vld [vmem:[#allocation2 + $0x1c8] sm:$0xff]
    %v334 = vld [vmem:[#allocation2 + $0x1d0] sm:$0xff]
    %v335 = vld [vmem:[#allocation2 + $0x1d8] sm:$0xff]
    %v336 = vld [vmem:[#allocation2 + $0x1e0] sm:$0xff]
    %v337 = vld [vmem:[#allocation2 + $0x1e8] sm:$0xff]
    %v338 = vld [vmem:[#allocation2 + $0x1f0] sm:$0xff]
    %v339 = vld [vmem:[#allocation2 + $0x1f8] sm:$0xff]
    %v340 = vld [vmem:[%s5] sm:$0xf]
    %v342 = vlaneseq
    %v343 = vshrl.u32 %v342, 7
    %v344 = vsub.s32 0, %v343
    %v345 = vrot.slane %v340, %v344
    %v346 = vlaneseq
    %v347 = vshrl.u32 %v346, 7
    %v348 = vsub.s32 1, %v347
    %v349 = vrot.slane %v340, %v348
    %v350 = vlaneseq
    %v351 = vshrl.u32 %v350, 7
    %v352 = vsub.s32 2, %v351
    %v353 = vrot.slane %v340, %v352
    %v354 = vlaneseq
    %v355 = vshrl.u32 %v354, 7
    %v356 = vsub.s32 3, %v355
    %v357 = vrot.slane %v340, %v356
    %362 = vmatprep.subr.mxu0 %v277
    %363 = vmatpush1.msra.mxu0 %v276
    %364 = vmatprep.subr.mxu0 %v281
    %365 = vmatpush1.msra.mxu0 %v280
    %366 = vmatprep.subr.mxu0 %v285
    %367 = vmatpush1.msra.mxu0 %v284
    %368 = vmatprep.subr.mxu0 %v289
    %369 = vmatpush1.msra.mxu0 %v288
    %370 = vmatprep.subr.mxu0 %v293
    %371 = vmatpush1.msra.mxu0 %v292
    %372 = vmatprep.subr.mxu0 %v297
    %373 = vmatpush1.msra.mxu0 %v296
    %374 = vmatprep.subr.mxu0 %v301
    %375 = vmatpush1.msra.mxu0 %v300
    %376 = vmatprep.subr.mxu0 %v305
    %377 = vmatpush1.msra.mxu0 %v304
    %378 = vmatprep.subr.mxu0 %v309
    %379 = vmatpush1.msra.mxu0 %v308
    %380 = vmatprep.subr.mxu0 %v313
    %381 = vmatpush1.msra.mxu0 %v312
    %382 = vmatprep.subr.mxu0 %v317
    %383 = vmatpush1.msra.mxu0 %v316
    %384 = vmatprep.subr.mxu0 %v321
    %385 = vmatpush1.msra.mxu0 %v320
    %386 = vmatprep.subr.mxu0 %v325
    %387 = vmatpush1.msra.mxu0 %v324
    %388 = vmatprep.subr.mxu0 %v329
    %389 = vmatpush1.msra.mxu0 %v328
    %390 = vmatprep.subr.mxu0 %v333
    %391 = vmatpush1.msra.mxu0 %v332
    %392 = vmatprep.subr.mxu0 %v337
    %393 = vmatpush1.msra.mxu0 %v336
    %394 = vmatprep.subr.mxu0 0.0
    %395 = vmatpush1.msra.mxu0 0.0
    %396 = vmatprep.subr.mxu0 0.0
    %397 = vmatpush1.msra.mxu0 0.0
    %398 = vmatprep.subr.mxu0 0.0
    %399 = vmatpush1.msra.mxu0 0.0
    %400 = vmatprep.subr.mxu0 0.0
    %401 = vmatpush1.msra.mxu0 0.0
    %402 = vmatprep.subr.mxu0 0.0
    %403 = vmatpush1.msra.mxu0 0.0
    %404 = vmatprep.subr.mxu0 0.0
    %405 = vmatpush1.msra.mxu0 0.0
    %406 = vmatprep.subr.mxu0 0.0
    %407 = vmatpush1.msra.mxu0 0.0
    %408 = vmatprep.subr.mxu0 0.0
    %409 = vmatpush1.msra.mxu0 0.0
    %410 = vmatprep.subr.mxu0 0.0
    %411 = vmatpush1.msra.mxu0 0.0
    %412 = vmatprep.subr.mxu0 0.0
    %413 = vmatpush1.msra.mxu0 0.0
    %414 = vmatprep.subr.mxu0 0.0
    %415 = vmatpush1.msra.mxu0 0.0
    %416 = vmatprep.subr.mxu0 0.0
    %417 = vmatpush1.msra.mxu0 0.0
    %418 = vmatprep.subr.mxu0 0.0
    %419 = vmatpush1.msra.mxu0 0.0
    %420 = vmatprep.subr.mxu0 0.0
    %421 = vmatpush1.msra.mxu0 0.0
    %422 = vmatprep.subr.mxu0 0.0
    %423 = vmatpush1.msra.mxu0 0.0
    %424 = vmatprep.subr.mxu0 0.0
    %425 = vmatpush1.msra.mxu0 0.0
    %426 = vmatprep.mubr.f32.mxu0 0.0
    %427 = vmatmul.mubr.f32.gmra.mrb[0].mxu0 %v260
    %v428 = vpop.f32.mrb[0].mxu0
    %v429 = vadd.f32 %v345, %v428
    %v430 = vpop.f32.mrb[0].mxu0
    %v431 = vadd.f32 %v349, %v430
    %432 = vmatprep.mubr.f32.mxu0 0.0
    %433 = vmatmul.mubr.f32.gmra.mrb[0].mxu0 %v261
    %v434 = vpop.f32.mrb[0].mxu0
    %v435 = vadd.f32 %v345, %v434
    %v436 = vpop.f32.mrb[0].mxu0
    %v437 = vadd.f32 %v349, %v436
    %438 = vmatprep.mubr.f32.mxu0 0.0
    %439 = vmatmul.mubr.f32.gmra.mrb[0].mxu0 %v262
    %v440 = vpop.f32.mrb[0].mxu0
    %v441 = vadd.f32 %v345, %v440
    %v442 = vpop.f32.mrb[0].mxu0
    %v443 = vadd.f32 %v349, %v442
    %444 = vmatprep.mubr.f32.mxu0 0.0
    %445 = vmatmul.mubr.f32.gmra.mrb[0].mxu0 %v263
    %v446 = vpop.f32.mrb[0].mxu0
    %v447 = vadd.f32 %v345, %v446
    %v448 = vpop.f32.mrb[0].mxu0
    %v449 = vadd.f32 %v349, %v448
    %450 = vmatprep.mubr.f32.mxu0 0.0
    %451 = vmatmul.mubr.f32.gmra.mrb[0].mxu0 %v264
    %v452 = vpop.f32.mrb[0].mxu0
    %v453 = vadd.f32 %v345, %v452
    %v454 = vpop.f32.mrb[0].mxu0
    %v455 = vadd.f32 %v349, %v454
    %456 = vmatprep.mubr.f32.mxu0 0.0
    %457 = vmatmul.mubr.f32.gmra.mrb[0].mxu0 %v265
    %v458 = vpop.f32.mrb[0].mxu0
    %v459 = vadd.f32 %v345, %v458
    %v460 = vpop.f32.mrb[0].mxu0
    %v461 = vadd.f32 %v349, %v460
    %462 = vmatprep.mubr.f32.mxu0 0.0
    %463 = vmatmul.mubr.f32.gmra.mrb[0].mxu0 %v266
    %v464 = vpop.f32.mrb[0].mxu0
    %v465 = vadd.f32 %v345, %v464
    %v466 = vpop.f32.mrb[0].mxu0
    %v467 = vadd.f32 %v349, %v466
    %468 = vmatprep.mubr.f32.mxu0 0.0
    %469 = vmatmul.mubr.f32.gmra.mrb[0].mxu0 %v267
    %v470 = vpop.f32.mrb[0].mxu0
    %v471 = vadd.f32 %v345, %v470
    %v472 = vpop.f32.mrb[0].mxu0
    %v473 = vadd.f32 %v349, %v472
    %474 = vmatprep.mubr.f32.mxu0 0.0
    %475 = vmatmul.mubr.f32.gmra.mrb[0].mxu0 %v268
    %v476 = vpop.f32.mrb[0].mxu0
    %v477 = vadd.f32 %v345, %v476
    %v478 = vpop.f32.mrb[0].mxu0
    %v479 = vadd.f32 %v349, %v478
    %480 = vmatprep.mubr.f32.mxu0 0.0
    %481 = vmatmul.mubr.f32.gmra.mrb[0].mxu0 %v269
    %v482 = vpop.f32.mrb[0].mxu0
    %v483 = vadd.f32 %v345, %v482
    %v484 = vpop.f32.mrb[0].mxu0
    %v485 = vadd.f32 %v349, %v484
    %486 = vmatprep.mubr.f32.mxu0 0.0
    %487 = vmatmul.mubr.f32.gmra.mrb[0].mxu0 %v270
    %v488 = vpop.f32.mrb[0].mxu0
    %v489 = vadd.f32 %v345, %v488
    %v490 = vpop.f32.mrb[0].mxu0
    %v491 = vadd.f32 %v349, %v490
    %492 = vmatprep.mubr.f32.mxu0 0.0
    %493 = vmatmul.mubr.f32.gmra.mrb[0].mxu0 %v271
    %v494 = vpop.f32.mrb[0].mxu0
    %v495 = vadd.f32 %v345, %v494
    %v496 = vpop.f32.mrb[0].mxu0
    %v497 = vadd.f32 %v349, %v496
    %498 = vmatprep.mubr.f32.mxu0 0.0
    %499 = vmatmul.mubr.f32.gmra.mrb[0].mxu0 %v272
    %v500 = vpop.f32.mrb[0].mxu0
    %v501 = vadd.f32 %v345, %v500
    %v502 = vpop.f32.mrb[0].mxu0
    %v503 = vadd.f32 %v349, %v502
    %504 = vmatprep.mubr.f32.mxu0 0.0
    %505 = vmatmul.mubr.f32.gmra.mrb[0].mxu0 %v273
    %v506 = vpop.f32.mrb[0].mxu0
    %v507 = vadd.f32 %v345, %v506
    %v508 = vpop.f32.mrb[0].mxu0
    %v509 = vadd.f32 %v349, %v508
    %510 = vmatprep.mubr.f32.mxu0 0.0
    %511 = vmatmul.mubr.f32.gmra.mrb[0].mxu0 %v274
    %v512 = vpop.f32.mrb[0].mxu0
    %v513 = vadd.f32 %v345, %v512
    %v514 = vpop.f32.mrb[0].mxu0
    %v515 = vadd.f32 %v349, %v514
    %516 = vmatprep.mubr.f32.mxu0 0.0
    %517 = vmatmul.mubr.f32.gmra.mrb[0].mxu0 %v275
    %v518 = vpop.f32.mrb[0].mxu0
    %v519 = vadd.f32 %v345, %v518
    %v520 = vpop.f32.mrb[0].mxu0
    %v521 = vadd.f32 %v349, %v520
    %522 = vdwg.mxu0
    %523 = vmatprep.subr.mxu0 %v279
    %524 = vmatpush1.msra.mxu0 %v278
    %525 = vmatprep.subr.mxu0 %v283
    %526 = vmatpush1.msra.mxu0 %v282
    %527 = vmatprep.subr.mxu0 %v287
    %528 = vmatpush1.msra.mxu0 %v286
    %529 = vmatprep.subr.mxu0 %v291
    %530 = vmatpush1.msra.mxu0 %v290
    %531 = vmatprep.subr.mxu0 %v295
    %532 = vmatpush1.msra.mxu0 %v294
    %533 = vmatprep.subr.mxu0 %v299
    %534 = vmatpush1.msra.mxu0 %v298
    %535 = vmatprep.subr.mxu0 %v303
    %536 = vmatpush1.msra.mxu0 %v302
    %537 = vmatprep.subr.mxu0 %v307
    %538 = vmatpush1.msra.mxu0 %v306
    %539 = vmatprep.subr.mxu0 %v311
    %540 = vmatpush1.msra.mxu0 %v310
    %541 = vmatprep.subr.mxu0 %v315
    %542 = vmatpush1.msra.mxu0 %v314
    %543 = vmatprep.subr.mxu0 %v319
    %544 = vmatpush1.msra.mxu0 %v318
    %545 = vmatprep.subr.mxu0 %v323
    %546 = vmatpush1.msra.mxu0 %v322
    %547 = vmatprep.subr.mxu0 %v327
    %548 = vmatpush1.msra.mxu0 %v326
    %549 = vmatprep.subr.mxu0 %v331
    %550 = vmatpush1.msra.mxu0 %v330
    %551 = vmatprep.subr.mxu0 %v335
    %552 = vmatpush1.msra.mxu0 %v334
    %553 = vmatprep.subr.mxu0 %v339
    %554 = vmatpush1.msra.mxu0 %v338
    %555 = vmatprep.subr.mxu0 0.0
    %556 = vmatpush1.msra.mxu0 0.0
    %557 = vmatprep.subr.mxu0 0.0
    %558 = vmatpush1.msra.mxu0 0.0
    %559 = vmatprep.subr.mxu0 0.0
    %560 = vmatpush1.msra.mxu0 0.0
    %561 = vmatprep.subr.mxu0 0.0
    %562 = vmatpush1.msra.mxu0 0.0
    %563 = vmatprep.subr.mxu0 0.0
    %564 = vmatpush1.msra.mxu0 0.0
    %565 = vmatprep.subr.mxu0 0.0
    %566 = vmatpush1.msra.mxu0 0.0
    %567 = vmatprep.subr.mxu0 0.0
    %568 = vmatpush1.msra.mxu0 0.0
    %569 = vmatprep.subr.mxu0 0.0
    %570 = vmatpush1.msra.mxu0 0.0
    %571 = vmatprep.subr.mxu0 0.0
    %572 = vmatpush1.msra.mxu0 0.0
    %573 = vmatprep.subr.mxu0 0.0
    %574 = vmatpush1.msra.mxu0 0.0
    %575 = vmatprep.subr.mxu0 0.0
    %576 = vmatpush1.msra.mxu0 0.0
    %577 = vmatprep.subr.mxu0 0.0
    %578 = vmatpush1.msra.mxu0 0.0
    %579 = vmatprep.subr.mxu0 0.0
    %580 = vmatpush1.msra.mxu0 0.0
    %581 = vmatprep.subr.mxu0 0.0
    %582 = vmatpush1.msra.mxu0 0.0
    %583 = vmatprep.subr.mxu0 0.0
    %584 = vmatpush1.msra.mxu0 0.0
    %585 = vmatprep.subr.mxu0 0.0
    %586 = vmatpush1.msra.mxu0 0.0
    %587 = vmatprep.mubr.f32.mxu0 0.0
    %588 = vmatmul.mubr.f32.gmra.mrb[0].mxu0 %v260
    %v589 = vpop.f32.mrb[0].mxu0
    %v590 = vadd.f32 %v353, %v589
    %v591 = vpop.f32.mrb[0].mxu0
    %v592 = vadd.f32 %v357, %v591
    %593 = vmatprep.mubr.f32.mxu0 0.0
    %594 = vmatmul.mubr.f32.gmra.mrb[0].mxu0 %v261
    %v595 = vpop.f32.mrb[0].mxu0
    %v596 = vadd.f32 %v353, %v595
    %v597 = vpop.f32.mrb[0].mxu0
    %v598 = vadd.f32 %v357, %v597
    %599 = vmatprep.mubr.f32.mxu0 0.0
    %600 = vmatmul.mubr.f32.gmra.mrb[0].mxu0 %v262
    %v601 = vpop.f32.mrb[0].mxu0
    %v602 = vadd.f32 %v353, %v601
    %v603 = vpop.f32.mrb[0].mxu0
    %v604 = vadd.f32 %v357, %v603
    %605 = vmatprep.mubr.f32.mxu0 0.0
    %606 = vmatmul.mubr.f32.gmra.mrb[0].mxu0 %v263
    %v607 = vpop.f32.mrb[0].mxu0
    %v608 = vadd.f32 %v353, %v607
    %v609 = vpop.f32.mrb[0].mxu0
    %v610 = vadd.f32 %v357, %v609
    %611 = vmatprep.mubr.f32.mxu0 0.0
    %612 = vmatmul.mubr.f32.gmra.mrb[0].mxu0 %v264
    %v613 = vpop.f32.mrb[0].mxu0
    %v614 = vadd.f32 %v353, %v613
    %v615 = vpop.f32.mrb[0].mxu0
    %v616 = vadd.f32 %v357, %v615
    %617 = vmatprep.mubr.f32.mxu0 0.0
    %618 = vmatmul.mubr.f32.gmra.mrb[0].mxu0 %v265
    %v619 = vpop.f32.mrb[0].mxu0
    %v620 = vadd.f32 %v353, %v619
    %v621 = vpop.f32.mrb[0].mxu0
    %v622 = vadd.f32 %v357, %v621
    %623 = vmatprep.mubr.f32.mxu0 0.0
    %624 = vmatmul.mubr.f32.gmra.mrb[0].mxu0 %v266
    %v625 = vpop.f32.mrb[0].mxu0
    %v626 = vadd.f32 %v353, %v625
    %v627 = vpop.f32.mrb[0].mxu0
    %v628 = vadd.f32 %v357, %v627
    %629 = vmatprep.mubr.f32.mxu0 0.0
    %630 = vmatmul.mubr.f32.gmra.mrb[0].mxu0 %v267
    %v631 = vpop.f32.mrb[0].mxu0
    %v632 = vadd.f32 %v353, %v631
    %v633 = vpop.f32.mrb[0].mxu0
    %v634 = vadd.f32 %v357, %v633
    %635 = vmatprep.mubr.f32.mxu0 0.0
    %636 = vmatmul.mubr.f32.gmra.mrb[0].mxu0 %v268
    %v637 = vpop.f32.mrb[0].mxu0
    %v638 = vadd.f32 %v353, %v637
    %v639 = vpop.f32.mrb[0].mxu0
    %v640 = vadd.f32 %v357, %v639
    %641 = vmatprep.mubr.f32.mxu0 0.0
    %642 = vmatmul.mubr.f32.gmra.mrb[0].mxu0 %v269
    %v643 = vpop.f32.mrb[0].mxu0
    %v644 = vadd.f32 %v353, %v643
    %v645 = vpop.f32.mrb[0].mxu0
    %v646 = vadd.f32 %v357, %v645
    %647 = vmatprep.mubr.f32.mxu0 0.0
    %648 = vmatmul.mubr.f32.gmra.mrb[0].mxu0 %v270
    %v649 = vpop.f32.mrb[0].mxu0
    %v650 = vadd.f32 %v353, %v649
    %v651 = vpop.f32.mrb[0].mxu0
    %v652 = vadd.f32 %v357, %v651
    %653 = vmatprep.mubr.f32.mxu0 0.0
    %654 = vmatmul.mubr.f32.gmra.mrb[0].mxu0 %v271
    %v655 = vpop.f32.mrb[0].mxu0
    %v656 = vadd.f32 %v353, %v655
    %v657 = vpop.f32.mrb[0].mxu0
    %v658 = vadd.f32 %v357, %v657
    %659 = vmatprep.mubr.f32.mxu0 0.0
    %660 = vmatmul.mubr.f32.gmra.mrb[0].mxu0 %v272
    %v661 = vpop.f32.mrb[0].mxu0
    %v662 = vadd.f32 %v353, %v661
    %v663 = vpop.f32.mrb[0].mxu0
    %v664 = vadd.f32 %v357, %v663
    %665 = vmatprep.mubr.f32.mxu0 0.0
    %666 = vmatmul.mubr.f32.gmra.mrb[0].mxu0 %v273
    %v667 = vpop.f32.mrb[0].mxu0
    %v668 = vadd.f32 %v353, %v667
    %v669 = vpop.f32.mrb[0].mxu0
    %v670 = vadd.f32 %v357, %v669
    %671 = vmatprep.mubr.f32.mxu0 0.0
    %672 = vmatmul.mubr.f32.gmra.mrb[0].mxu0 %v274
    %v673 = vpop.f32.mrb[0].mxu0
    %v674 = vadd.f32 %v353, %v673
    %v675 = vpop.f32.mrb[0].mxu0
    %v676 = vadd.f32 %v357, %v675
    %677 = vmatprep.mubr.f32.mxu0 0.0
    %678 = vmatmul.mubr.f32.gmra.mrb[0].mxu0 %v275
    %v679 = vpop.f32.mrb[0].mxu0
    %v680 = vadd.f32 %v353, %v679
    %v681 = vpop.f32.mrb[0].mxu0
    %v682 = vadd.f32 %v357, %v681
    %683 = vdwg.mxu0
    %v684 = vld [vmem:[%s1] sm:$0xff]
    %v685 = vld [vmem:[%s1 + $0x8] sm:$0xff]
    %v686 = vld [vmem:[%s1 + $0x10] sm:$0xff]
    %v687 = vld [vmem:[%s1 + $0x18] sm:$0xff]
    %v688 = vld [vmem:[%s1 + $0x20] sm:$0xff]
    %v689 = vld [vmem:[%s1 + $0x28] sm:$0xff]
    %v690 = vld [vmem:[%s1 + $0x30] sm:$0xff]
    %v691 = vld [vmem:[%s1 + $0x38] sm:$0xff]
    %v692 = vld [vmem:[%s1 + $0x40] sm:$0xff]
    %v693 = vld [vmem:[%s1 + $0x48] sm:$0xff]
    %v694 = vld [vmem:[%s1 + $0x50] sm:$0xff]
    %v695 = vld [vmem:[%s1 + $0x58] sm:$0xff]
    %v696 = vld [vmem:[%s1 + $0x60] sm:$0xff]
    %v697 = vld [vmem:[%s1 + $0x68] sm:$0xff]
    %v698 = vld [vmem:[%s1 + $0x70] sm:$0xff]
    %v699 = vld [vmem:[%s1 + $0x78] sm:$0xff]
    %701 = vset.pattern.permute.xlu0 0
    %702 = vperm.xlu0 %701, %v684
    %v703 = vpop.permute.xlu0 %702
    %706 = vset.pattern.permute.xlu0 0
    %707 = vperm.xlu0 %706, %v685
    %v708 = vpop.permute.xlu0 %707
    %711 = vset.pattern.permute.xlu0 0
    %712 = vperm.xlu0 %711, %v686
    %v713 = vpop.permute.xlu0 %712
    %716 = vset.pattern.permute.xlu0 0
    %717 = vperm.xlu0 %716, %v687
    %v718 = vpop.permute.xlu0 %717
    %721 = vset.pattern.permute.xlu0 0
    %722 = vperm.xlu0 %721, %v688
    %v723 = vpop.permute.xlu0 %722
    %726 = vset.pattern.permute.xlu0 0
    %727 = vperm.xlu0 %726, %v689
    %v728 = vpop.permute.xlu0 %727
    %731 = vset.pattern.permute.xlu0 0
    %732 = vperm.xlu0 %731, %v690
    %v733 = vpop.permute.xlu0 %732
    %736 = vset.pattern.permute.xlu0 0
    %737 = vperm.xlu0 %736, %v691
    %v738 = vpop.permute.xlu0 %737
    %741 = vset.pattern.permute.xlu0 0
    %742 = vperm.xlu0 %741, %v692
    %v743 = vpop.permute.xlu0 %742
    %746 = vset.pattern.permute.xlu0 0
    %747 = vperm.xlu0 %746, %v693
    %v748 = vpop.permute.xlu0 %747
    %751 = vset.pattern.permute.xlu0 0
    %752 = vperm.xlu0 %751, %v694
    %v753 = vpop.permute.xlu0 %752
    %756 = vset.pattern.permute.xlu0 0
    %757 = vperm.xlu0 %756, %v695
    %v758 = vpop.permute.xlu0 %757
    %761 = vset.pattern.permute.xlu0 0
    %762 = vperm.xlu0 %761, %v696
    %v763 = vpop.permute.xlu0 %762
    %766 = vset.pattern.permute.xlu0 0
    %767 = vperm.xlu0 %766, %v697
    %v768 = vpop.permute.xlu0 %767
    %771 = vset.pattern.permute.xlu0 0
    %772 = vperm.xlu0 %771, %v698
    %v773 = vpop.permute.xlu0 %772
    %776 = vset.pattern.permute.xlu0 0
    %777 = vperm.xlu0 %776, %v699
    %v778 = vpop.permute.xlu0 %777
    %v780 = vmul.f32 %v703, %v429
    %v781 = vmul.f32 %v708, %v435
    %v782 = vmul.f32 %v713, %v441
    %v783 = vmul.f32 %v718, %v447
    %v784 = vmul.f32 %v723, %v453
    %v785 = vmul.f32 %v728, %v459
    %v786 = vmul.f32 %v733, %v465
    %v787 = vmul.f32 %v738, %v471
    %v788 = vmul.f32 %v743, %v477
    %v789 = vmul.f32 %v748, %v483
    %v790 = vmul.f32 %v753, %v489
    %v791 = vmul.f32 %v758, %v495
    %v792 = vmul.f32 %v763, %v501
    %v793 = vmul.f32 %v768, %v507
    %v794 = vmul.f32 %v773, %v513
    %v795 = vmul.f32 %v778, %v519
    %796 = vset.pattern.permute.xlu0 1
    %797 = vperm.xlu0 %796, %v684
    %v798 = vpop.permute.xlu0 %797
    %800 = vset.pattern.permute.xlu0 1
    %801 = vperm.xlu0 %800, %v685
    %v802 = vpop.permute.xlu0 %801
    %804 = vset.pattern.permute.xlu0 1
    %805 = vperm.xlu0 %804, %v686
    %v806 = vpop.permute.xlu0 %805
    %808 = vset.pattern.permute.xlu0 1
    %809 = vperm.xlu0 %808, %v687
    %v810 = vpop.permute.xlu0 %809
    %812 = vset.pattern.permute.xlu0 1
    %813 = vperm.xlu0 %812, %v688
    %v814 = vpop.permute.xlu0 %813
    %816 = vset.pattern.permute.xlu0 1
    %817 = vperm.xlu0 %816, %v689
    %v818 = vpop.permute.xlu0 %817
    %820 = vset.pattern.permute.xlu0 1
    %821 = vperm.xlu0 %820, %v690
    %v822 = vpop.permute.xlu0 %821
    %824 = vset.pattern.permute.xlu0 1
    %825 = vperm.xlu0 %824, %v691
    %v826 = vpop.permute.xlu0 %825
    %828 = vset.pattern.permute.xlu0 1
    %829 = vperm.xlu0 %828, %v692
    %v830 = vpop.permute.xlu0 %829
    %832 = vset.pattern.permute.xlu0 1
    %833 = vperm.xlu0 %832, %v693
    %v834 = vpop.permute.xlu0 %833
    %836 = vset.pattern.permute.xlu0 1
    %837 = vperm.xlu0 %836, %v694
    %v838 = vpop.permute.xlu0 %837
    %840 = vset.pattern.permute.xlu0 1
    %841 = vperm.xlu0 %840, %v695
    %v842 = vpop.permute.xlu0 %841
    %844 = vset.pattern.permute.xlu0 1
    %845 = vperm.xlu0 %844, %v696
    %v846 = vpop.permute.xlu0 %845
    %848 = vset.pattern.permute.xlu0 1
    %849 = vperm.xlu0 %848, %v697
    %v850 = vpop.permute.xlu0 %849
    %852 = vset.pattern.permute.xlu0 1
    %853 = vperm.xlu0 %852, %v698
    %v854 = vpop.permute.xlu0 %853
    %856 = vset.pattern.permute.xlu0 1
    %857 = vperm.xlu0 %856, %v699
    %v858 = vpop.permute.xlu0 %857
    %v860 = vmul.f32 %v798, %v431
    %v861 = vmul.f32 %v802, %v437
    %v862 = vmul.f32 %v806, %v443
    %v863 = vmul.f32 %v810, %v449
    %v864 = vmul.f32 %v814, %v455
    %v865 = vmul.f32 %v818, %v461
    %v866 = vmul.f32 %v822, %v467
    %v867 = vmul.f32 %v826, %v473
    %v868 = vmul.f32 %v830, %v479
    %v869 = vmul.f32 %v834, %v485
    %v870 = vmul.f32 %v838, %v491
    %v871 = vmul.f32 %v842, %v497
    %v872 = vmul.f32 %v846, %v503
    %v873 = vmul.f32 %v850, %v509
    %v874 = vmul.f32 %v854, %v515
    %v875 = vmul.f32 %v858, %v521
    %v876 = vadd.f32 %v780, %v860
    %v877 = vadd.f32 %v781, %v861
    %v878 = vadd.f32 %v782, %v862
    %v879 = vadd.f32 %v783, %v863
    %v880 = vadd.f32 %v784, %v864
    %v881 = vadd.f32 %v785, %v865
    %v882 = vadd.f32 %v786, %v866
    %v883 = vadd.f32 %v787, %v867
    %v884 = vadd.f32 %v788, %v868
    %v885 = vadd.f32 %v789, %v869
    %v886 = vadd.f32 %v790, %v870
    %v887 = vadd.f32 %v791, %v871
    %v888 = vadd.f32 %v792, %v872
    %v889 = vadd.f32 %v793, %v873
    %v890 = vadd.f32 %v794, %v874
    %v891 = vadd.f32 %v795, %v875
    %892 = vset.pattern.permute.xlu0 2
    %893 = vperm.xlu0 %892, %v684
    %v894 = vpop.permute.xlu0 %893
    %896 = vset.pattern.permute.xlu0 2
    %897 = vperm.xlu0 %896, %v685
    %v898 = vpop.permute.xlu0 %897
    %900 = vset.pattern.permute.xlu0 2
    %901 = vperm.xlu0 %900, %v686
    %v902 = vpop.permute.xlu0 %901
    %904 = vset.pattern.permute.xlu0 2
    %905 = vperm.xlu0 %904, %v687
    %v906 = vpop.permute.xlu0 %905
    %908 = vset.pattern.permute.xlu0 2
    %909 = vperm.xlu0 %908, %v688
    %v910 = vpop.permute.xlu0 %909
    %912 = vset.pattern.permute.xlu0 2
    %913 = vperm.xlu0 %912, %v689
    %v914 = vpop.permute.xlu0 %913
    %916 = vset.pattern.permute.xlu0 2
    %917 = vperm.xlu0 %916, %v690
    %v918 = vpop.permute.xlu0 %917
    %920 = vset.pattern.permute.xlu0 2
    %921 = vperm.xlu0 %920, %v691
    %v922 = vpop.permute.xlu0 %921
    %924 = vset.pattern.permute.xlu0 2
    %925 = vperm.xlu0 %924, %v692
    %v926 = vpop.permute.xlu0 %925
    %928 = vset.pattern.permute.xlu0 2
    %929 = vperm.xlu0 %928, %v693
    %v930 = vpop.permute.xlu0 %929
    %932 = vset.pattern.permute.xlu0 2
    %933 = vperm.xlu0 %932, %v694
    %v934 = vpop.permute.xlu0 %933
    %936 = vset.pattern.permute.xlu0 2
    %937 = vperm.xlu0 %936, %v695
    %v938 = vpop.permute.xlu0 %937
    %940 = vset.pattern.permute.xlu0 2
    %941 = vperm.xlu0 %940, %v696
    %v942 = vpop.permute.xlu0 %941
    %944 = vset.pattern.permute.xlu0 2
    %945 = vperm.xlu0 %944, %v697
    %v946 = vpop.permute.xlu0 %945
    %948 = vset.pattern.permute.xlu0 2
    %949 = vperm.xlu0 %948, %v698
    %v950 = vpop.permute.xlu0 %949
    %952 = vset.pattern.permute.xlu0 2
    %953 = vperm.xlu0 %952, %v699
    %v954 = vpop.permute.xlu0 %953
    %v956 = vmul.f32 %v894, %v590
    %v957 = vmul.f32 %v898, %v596
    %v958 = vmul.f32 %v902, %v602
    %v959 = vmul.f32 %v906, %v608
    %v960 = vmul.f32 %v910, %v614
    %v961 = vmul.f32 %v914, %v620
    %v962 = vmul.f32 %v918, %v626
    %v963 = vmul.f32 %v922, %v632
    %v964 = vmul.f32 %v926, %v638
    %v965 = vmul.f32 %v930, %v644
    %v966 = vmul.f32 %v934, %v650
    %v967 = vmul.f32 %v938, %v656
    %v968 = vmul.f32 %v942, %v662
    %v969 = vmul.f32 %v946, %v668
    %v970 = vmul.f32 %v950, %v674
    %v971 = vmul.f32 %v954, %v680
    %v972 = vadd.f32 %v876, %v956
    %v973 = vadd.f32 %v877, %v957
    %v974 = vadd.f32 %v878, %v958
    %v975 = vadd.f32 %v879, %v959
    %v976 = vadd.f32 %v880, %v960
    %v977 = vadd.f32 %v881, %v961
    %v978 = vadd.f32 %v882, %v962
    %v979 = vadd.f32 %v883, %v963
    %v980 = vadd.f32 %v884, %v964
    %v981 = vadd.f32 %v885, %v965
    %v982 = vadd.f32 %v886, %v966
    %v983 = vadd.f32 %v887, %v967
    %v984 = vadd.f32 %v888, %v968
    %v985 = vadd.f32 %v889, %v969
    %v986 = vadd.f32 %v890, %v970
    %v987 = vadd.f32 %v891, %v971
    %988 = vset.pattern.permute.xlu0 3
    %989 = vperm.xlu0 %988, %v684
    %v990 = vpop.permute.xlu0 %989
    %992 = vset.pattern.permute.xlu0 3
    %993 = vperm.xlu0 %992, %v685
    %v994 = vpop.permute.xlu0 %993
    %996 = vset.pattern.permute.xlu0 3
    %997 = vperm.xlu0 %996, %v686
    %v998 = vpop.permute.xlu0 %997
    %1000 = vset.pattern.permute.xlu0 3
    %1001 = vperm.xlu0 %1000, %v687
    %v1002 = vpop.permute.xlu0 %1001
    %1004 = vset.pattern.permute.xlu0 3
    %1005 = vperm.xlu0 %1004, %v688
    %v1006 = vpop.permute.xlu0 %1005
    %1008 = vset.pattern.permute.xlu0 3
    %1009 = vperm.xlu0 %1008, %v689
    %v1010 = vpop.permute.xlu0 %1009
    %1012 = vset.pattern.permute.xlu0 3
    %1013 = vperm.xlu0 %1012, %v690
    %v1014 = vpop.permute.xlu0 %1013
    %1016 = vset.pattern.permute.xlu0 3
    %1017 = vperm.xlu0 %1016, %v691
    %v1018 = vpop.permute.xlu0 %1017
    %1020 = vset.pattern.permute.xlu0 3
    %1021 = vperm.xlu0 %1020, %v692
    %v1022 = vpop.permute.xlu0 %1021
    %1024 = vset.pattern.permute.xlu0 3
    %1025 = vperm.xlu0 %1024, %v693
    %v1026 = vpop.permute.xlu0 %1025
    %1028 = vset.pattern.permute.xlu0 3
    %1029 = vperm.xlu0 %1028, %v694
    %v1030 = vpop.permute.xlu0 %1029
    %1032 = vset.pattern.permute.xlu0 3
    %1033 = vperm.xlu0 %1032, %v695
    %v1034 = vpop.permute.xlu0 %1033
    %1036 = vset.pattern.permute.xlu0 3
    %1037 = vperm.xlu0 %1036, %v696
    %v1038 = vpop.permute.xlu0 %1037
    %1040 = vset.pattern.permute.xlu0 3
    %1041 = vperm.xlu0 %1040, %v697
    %v1042 = vpop.permute.xlu0 %1041
    %1044 = vset.pattern.permute.xlu0 3
    %1045 = vperm.xlu0 %1044, %v698
    %v1046 = vpop.permute.xlu0 %1045
    %1048 = vset.pattern.permute.xlu0 3
    %1049 = vperm.xlu0 %1048, %v699
    %v1050 = vpop.permute.xlu0 %1049
    %v1052 = vmul.f32 %v990, %v592
    %v1053 = vmul.f32 %v994, %v598
    %v1054 = vmul.f32 %v998, %v604
    %v1055 = vmul.f32 %v1002, %v610
    %v1056 = vmul.f32 %v1006, %v616
    %v1057 = vmul.f32 %v1010, %v622
    %v1058 = vmul.f32 %v1014, %v628
    %v1059 = vmul.f32 %v1018, %v634
    %v1060 = vmul.f32 %v1022, %v640
    %v1061 = vmul.f32 %v1026, %v646
    %v1062 = vmul.f32 %v1030, %v652
    %v1063 = vmul.f32 %v1034, %v658
    %v1064 = vmul.f32 %v1038, %v664
    %v1065 = vmul.f32 %v1042, %v670
    %v1066 = vmul.f32 %v1046, %v676
    %v1067 = vmul.f32 %v1050, %v682
    %v1068 = vadd.f32 %v972, %v1052
    %v1069 = vadd.f32 %v973, %v1053
    %v1070 = vadd.f32 %v974, %v1054
    %v1071 = vadd.f32 %v975, %v1055
    %v1072 = vadd.f32 %v976, %v1056
    %v1073 = vadd.f32 %v977, %v1057
    %v1074 = vadd.f32 %v978, %v1058
    %v1075 = vadd.f32 %v979, %v1059
    %v1076 = vadd.f32 %v980, %v1060
    %v1077 = vadd.f32 %v981, %v1061
    %v1078 = vadd.f32 %v982, %v1062
    %v1079 = vadd.f32 %v983, %v1063
    %v1080 = vadd.f32 %v984, %v1064
    %v1081 = vadd.f32 %v985, %v1065
    %v1082 = vadd.f32 %v986, %v1066
    %v1083 = vadd.f32 %v987, %v1067
    %v1084 = vpack.c.bf16 %v1069, %v1068
    %v1085 = vpack.c.bf16 %v1071, %v1070
    %v1086 = vpack.c.bf16 %v1073, %v1072
    %v1087 = vpack.c.bf16 %v1075, %v1074
    %v1088 = vpack.c.bf16 %v1077, %v1076
    %v1089 = vpack.c.bf16 %v1079, %v1078
    %v1090 = vpack.c.bf16 %v1081, %v1080
    %v1091 = vpack.c.bf16 %v1083, %v1082
    %v1100 = vunpack.c.l.b16 %v1084
    %v1101 = vunpack.c.h.b16 %v1084
    %v1102 = vunpack.c.l.b16 %v1085
    %v1103 = vunpack.c.h.b16 %v1085
    %v1104 = vunpack.c.l.b16 %v1086
    %v1105 = vunpack.c.h.b16 %v1086
    %v1106 = vunpack.c.l.b16 %v1087
    %v1107 = vunpack.c.h.b16 %v1087
    %v1108 = vunpack.c.l.b16 %v1088
    %v1109 = vunpack.c.h.b16 %v1088
    %v1110 = vunpack.c.l.b16 %v1089
    %v1111 = vunpack.c.h.b16 %v1089
    %v1112 = vunpack.c.l.b16 %v1090
    %v1113 = vunpack.c.h.b16 %v1090
    %v1114 = vunpack.c.l.b16 %v1091
    %v1115 = vunpack.c.h.b16 %v1091
    %v1116 = vpack.c.b16 %v1100, %v1100
    %v1117 = vpack.c.b16 %v1101, %v1101
    %v1118 = vpack.c.b16 %v1102, %v1102
    %v1119 = vpack.c.b16 %v1103, %v1103
    %v1120 = vpack.c.b16 %v1104, %v1104
    %v1121 = vpack.c.b16 %v1105, %v1105
    %v1122 = vpack.c.b16 %v1106, %v1106
    %v1123 = vpack.c.b16 %v1107, %v1107
    %v1124 = vpack.c.b16 %v1108, %v1108
    %v1125 = vpack.c.b16 %v1109, %v1109
    %v1126 = vpack.c.b16 %v1110, %v1110
    %v1127 = vpack.c.b16 %v1111, %v1111
    %v1128 = vpack.c.b16 %v1112, %v1112
    %v1129 = vpack.c.b16 %v1113, %v1113
    %v1130 = vpack.c.b16 %v1114, %v1114
    %v1131 = vpack.c.b16 %v1115, %v1115
    %1148 = vst [vmem:[#allocation5] sm:$0xf] %v1116
    %1149 = vst [vmem:[#allocation5 + $0x4] sm:$0xf] %v1117
    %1150 = vst [vmem:[#allocation5 + $0x8] sm:$0xf] %v1118
    %1151 = vst [vmem:[#allocation5 + $0xc] sm:$0xf] %v1119
    %1152 = vst [vmem:[#allocation5 + $0x10] sm:$0xf] %v1120
    %1153 = vst [vmem:[#allocation5 + $0x14] sm:$0xf] %v1121
    %1154 = vst [vmem:[#allocation5 + $0x18] sm:$0xf] %v1122
    %1155 = vst [vmem:[#allocation5 + $0x1c] sm:$0xf] %v1123
    %1156 = vst [vmem:[#allocation5 + $0x20] sm:$0xf] %v1124
    %1157 = vst [vmem:[#allocation5 + $0x24] sm:$0xf] %v1125
    %1158 = vst [vmem:[#allocation5 + $0x28] sm:$0xf] %v1126
    %1159 = vst [vmem:[#allocation5 + $0x2c] sm:$0xf] %v1127
    %1160 = vst [vmem:[#allocation5 + $0x30] sm:$0xf] %v1128
    %1161 = vst [vmem:[#allocation5 + $0x34] sm:$0xf] %v1129
    %1162 = vst [vmem:[#allocation5 + $0x38] sm:$0xf] %v1130
    %1163 = vst [vmem:[#allocation5 + $0x3c] sm:$0xf] %v1131
    // Predicated region
    $region30: #{tpu_custom_call.1} parent=1 // pred_check
      _
    $region31: #{tpu_custom_call.1} parent=1 // pred_check_branch
      %1165 = sbr.rel (0) target = $region33
    $region32: #{tpu_custom_call.1} parent=1 // pred_region
      %s1167 = ssub.s32 1024, 1024
      %1168 = vsyncadd [#allocation4], %s1167
      %s1169 = sshll.u32 [#allocation5], 4
      %s1170 = int_to_ptr.vmem [resolvable:$true] %s1169
      %1175 = dma.vmem_to_hbm [thread:$0]  %s1170, 1024, %s6, [#allocation4], 64, 64, 4
    $region33: #{tpu_custom_call.1} parent=1 // pred_fallthru
      _
    // Predicated region
    $region34: #{tpu_custom_call.1} parent=1 // pred_check
      _
    $region35: #{tpu_custom_call.1} parent=1 // pred_check_branch
      %1177 = sbr.rel (0) target = $region37
    $region36: #{tpu_custom_call.1} parent=1 // pred_region
      %1178 = dma.done [#allocation4], 1024
    $region37: #{tpu_custom_call.1} parent=1 // pred_fallthru
      _
    %1179 = vsyncpa [#allocation3], 1
    %1180 = vsyncpa [#allocation4], 1

</llo_original>
